<compile_context>
chip_gen: v5e
topology: v5e:2x2
jax: 0.10.0
libtpu: 0.0.40
codegen_flags: <defaults>
</compile_context>

<pallas_src>
import functools

import jax
import jax.numpy as jnp
from jax.experimental import pallas as pl
from jax.experimental.pallas import tpu as pltpu


def _make_divisible(v, divisor, min_value=None):
    if min_value is None:
        min_value = divisor
    new_v = max(min_value, int(v + divisor / 2) // divisor * divisor)
    if new_v < 0.9 * v:
        new_v += divisor
    return new_v


def _se_kernel(x_ref, w1t_ref, b1_ref, w2t_ref, b2_ref, o_ref, *, inv_hw):
    # x_ref: (B_TILE, C, HW_pad) block (padded spatial lanes are zero).
    x = x_ref[...]

    # Squeeze: adaptive_avg_pool2d(input, 1) == per-(sample, channel) spatial
    # mean. Accumulate in f32; divide by the TRUE H*W via a constant multiply
    # so zero padding does not bias the mean.
    pooled = jnp.sum(x.astype(jnp.float32), axis=-1) * inv_hw          # (B, C)

    # Excite: two tiny FCs as batched matmuls on the MXU (weights already
    # transposed in the wrapper, biases are lane rows).
    s1 = jnp.dot(pooled, w1t_ref[...],
                 preferred_element_type=jnp.float32) + b1_ref[...]     # (B, S)
    s1 = jnp.clip(s1, 0.0, 6.0)                                        # ReLU6
    s2 = jnp.dot(s1, w2t_ref[...],
                 preferred_element_type=jnp.float32) + b2_ref[...]     # (B, C)

    # hardsigmoid: clip((x + 3) / 6, 0, 1)  (constant multiply, no divide)
    scale = jnp.clip((s2 + 3.0) * (1.0 / 6.0), 0.0, 1.0)               # (B, C)

    # Scale: broadcast multiply in the input dtype (residual=False).
    o_ref[...] = x * scale[:, :, None].astype(x.dtype)


def _pick_batch_tile(n, c, hw_pad, itemsize, target_block_bytes=4 << 20):
    """Largest divisor of n whose (VMEM-padded) block stays ~<= 4 MiB."""
    c_pad = ((c + 7) // 8) * 8                      # sublane padding in VMEM
    per_sample = max(1, c_pad * hw_pad * itemsize)
    b = max(1, min(n, target_block_bytes // per_sample))
    while n % b:
        b -= 1
    return b


def _vmem_limit_bytes(b_tile, c, hw_pad, itemsize):
    c_pad = ((c + 7) // 8) * 8
    block = b_tile * c_pad * hw_pad * itemsize
    # input + output, double-buffered, plus slack for weights / temporaries.
    need = 4 * block + (2 << 20)
    # Cap well under v7x's 64 MiB physical VMEM; v5e/v6e have 128 MiB.
    return int(min(max(need, 32 << 20), 48 << 20))


def squeeze_excitation(x_nchw, w1, b1, w2, b2):
    """x_nchw: (N, C, H, W). w1: (S, C), b1: (S, 1), w2: (C, S), b2: (C, 1)."""
    N, C, H, W = x_nchw.shape
    S = w1.shape[0]
    HW = H * W
    HW_pad = ((HW + 127) // 128) * 128              # lane-dense stores

    x = x_nchw.reshape(N, C, HW)
    if HW_pad != HW:
        x = jnp.pad(x, ((0, 0), (0, 0), (0, HW_pad - HW)))

    # Pre-transpose weights so the kernel does plain row-major matmuls.
    w1t = jnp.transpose(w1).astype(jnp.float32)      # (C, S)
    w2t = jnp.transpose(w2).astype(jnp.float32)      # (S, C)
    b1r = b1.reshape(1, S).astype(jnp.float32)       # (1, S)
    b2r = b2.reshape(1, C).astype(jnp.float32)       # (1, C)

    itemsize = jnp.dtype(x_nchw.dtype).itemsize
    b_tile = _pick_batch_tile(N, C, HW_pad, itemsize)
    grid = (N // b_tile,)

    kernel = functools.partial(_se_kernel, inv_hw=1.0 / HW)

    flops = 2 * N * C * HW + 4 * N * C * S + 8 * N * C
    bytes_accessed = (2 * N * C * HW * itemsize
                      + 4 * (w1.size + w2.size + b1.size + b2.size))

    out = pl.pallas_call(
        kernel,
        out_shape=jax.ShapeDtypeStruct((N, C, HW_pad), x_nchw.dtype),
        grid_spec=pltpu.PrefetchScalarGridSpec(
            num_scalar_prefetch=0,
            grid=grid,
            in_specs=[
                pl.BlockSpec((b_tile, C, HW_pad), lambda n: (n, 0, 0)),
                pl.BlockSpec((C, S), lambda n: (0, 0)),
                pl.BlockSpec((1, S), lambda n: (0, 0)),
                pl.BlockSpec((S, C), lambda n: (0, 0)),
                pl.BlockSpec((1, C), lambda n: (0, 0)),
            ],
            out_specs=pl.BlockSpec((b_tile, C, HW_pad), lambda n: (n, 0, 0)),
        ),
        compiler_params=pltpu.CompilerParams(
            dimension_semantics=("parallel",),
            vmem_limit_bytes=_vmem_limit_bytes(b_tile, C, HW_pad, itemsize),
        ),
        cost_estimate=pl.CostEstimate(
            flops=flops, transcendentals=0, bytes_accessed=bytes_accessed),
    )(x, w1t, b1r, w2t, b2r)

    if HW_pad != HW:
        out = out[:, :, :HW]
    return out.reshape(N, C, H, W)


def _reference(x, w1, b1, w2, b2):
    pooled = jnp.mean(x, axis=(2, 3), keepdims=True)                     # (N,C,1,1)
    s1 = jnp.einsum('sc,ncij->nsij', w1, pooled) + b1[None, :, :, None]  # (N,S,1,1)
    s1 = jnp.clip(s1, 0.0, 6.0)
    s2 = jnp.einsum('cs,nsij->ncij', w2, s1) + b2[None, :, :, None]      # (N,C,1,1)
    scale = jnp.clip((s2 + 3.0) / 6.0, 0.0, 1.0)
    return scale * x


def _run_case(key, N, C, H, W):
    S = _make_divisible(C // 4, 8)
    kx, k1, k2, k3, k4 = jax.random.split(key, 5)
    x = jax.random.normal(kx, (N, C, H, W), dtype=jnp.float32)
    w1 = jax.random.normal(k1, (S, C), dtype=jnp.float32) * 0.5   # fc1.weight (S,C,1,1)
    b1 = jax.random.normal(k2, (S, 1), dtype=jnp.float32) * 0.1   # fc1.bias
    w2 = jax.random.normal(k3, (C, S), dtype=jnp.float32) * 0.5   # fc2.weight (C,S,1,1)
    b2 = jax.random.normal(k4, (C, 1), dtype=jnp.float32) * 0.1   # fc2.bias

    out = jax.block_until_ready(squeeze_excitation(x, w1, b1, w2, b2))
    ref = _reference(x, w1, b1, w2, b2)
    assert out.shape == (N, C, H, W)
    assert jnp.allclose(out, ref, atol=1e-4, rtol=1e-4)


if __name__ == "__main__":
    # Module config: input_channels=4, squeeze_factor=4, lightweight=True, residual=False
    key = jax.random.PRNGKey(0)
    k_a, k_b = jax.random.split(key)

    # Primary small test (matches module defaults): N=2, C=4, 16x16 spatial.
    _run_case(k_a, N=2, C=4, H=16, W=16)

    # Secondary test exercising the lane-padding path (H*W = 49 -> padded to 128).
    _run_case(k_b, N=3, C=16, H=7, W=7)

    print("KERNEL_OK")
</pallas_src>

<mosaic_0001>
module attributes {stable_mosaic.version = 11 : i64} {
  func.func @_se_kernel(%arg0: i32, %arg1: memref<2x4x256xf32, #tpu.memory_space<vmem>>, %arg2: memref<4x8xf32, #tpu.memory_space<vmem>>, %arg3: memref<1x8xf32, #tpu.memory_space<vmem>>, %arg4: memref<8x4xf32, #tpu.memory_space<vmem>>, %arg5: memref<1x4xf32, #tpu.memory_space<vmem>>, %arg6: memref<2x4x256xf32, #tpu.memory_space<vmem>>) attributes {dimension_semantics = [#tpu.dimension_semantics<parallel>], iteration_bounds = array<i64: 1>, scalar_prefetch = 0 : i64, scratch_operands = 0 : i64, tpu.core_type = #tpu.core_type<tc>, window_params = [{transform_indices = @transform_0, window_bounds = array<i64: 2, 4, 256>}, {pipeline_mode = #tpu.pipeline_mode<synchronous>, transform_indices = @transform_1, window_bounds = array<i64: 4, 8>}, {pipeline_mode = #tpu.pipeline_mode<synchronous>, transform_indices = @transform_2, window_bounds = array<i64: 1, 8>}, {pipeline_mode = #tpu.pipeline_mode<synchronous>, transform_indices = @transform_3, window_bounds = array<i64: 8, 4>}, {pipeline_mode = #tpu.pipeline_mode<synchronous>, transform_indices = @transform_4, window_bounds = array<i64: 1, 4>}, {transform_indices = @transform_5, window_bounds = array<i64: 2, 4, 256>}]} {
    %c0 = arith.constant 0 : index
    %c0_0 = arith.constant 0 : index
    %c0_1 = arith.constant 0 : index
    %0 = vector.load %arg1[%c0, %c0_0, %c0_1] : memref<2x4x256xf32, #tpu.memory_space<vmem>>, vector<2x4x256xf32>
    %cst = arith.constant dense<0.000000e+00> : vector<2x4xf32>
    %1 = vector.multi_reduction <add>, %0, %cst [2] : vector<2x4x256xf32> to vector<2x4xf32>
    %cst_2 = arith.constant 3.906250e-03 : f32
    %2 = vector.broadcast %cst_2 : f32 to vector<2x4xf32>
    %3 = arith.mulf %1, %2 : vector<2x4xf32>
    %c0_3 = arith.constant 0 : index
    %c0_4 = arith.constant 0 : index
    %4 = vector.load %arg2[%c0_3, %c0_4] : memref<4x8xf32, #tpu.memory_space<vmem>>, vector<4x8xf32>
    %cst_5 = arith.constant dense<0.000000e+00> : vector<2x8xf32>
    %5 = tpu.matmul %3, %4, %cst_5 {dimension_numbers = #tpu.dot_dimension_numbers<[1], [0], [0], [1], [0, 0, 1, 1], [], []>} : vector<2x4xf32>, vector<4x8xf32>, vector<2x8xf32> -> vector<2x8xf32>
    %c0_6 = arith.constant 0 : index
    %c0_7 = arith.constant 0 : index
    %6 = vector.load %arg3[%c0_6, %c0_7] : memref<1x8xf32, #tpu.memory_space<vmem>>, vector<1x8xf32>
    %7 = vector.broadcast %6 : vector<1x8xf32> to vector<2x8xf32>
    %8 = arith.addf %5, %7 : vector<2x8xf32>
    %cst_8 = arith.constant 0.000000e+00 : f32
    %cst_9 = arith.constant 6.000000e+00 : f32
    %9 = vector.broadcast %cst_8 : f32 to vector<2x8xf32>
    %10 = arith.maximumf %9, %8 : vector<2x8xf32>
    %11 = vector.broadcast %cst_9 : f32 to vector<2x8xf32>
    %12 = arith.minimumf %11, %10 : vector<2x8xf32>
    %c0_10 = arith.constant 0 : index
    %c0_11 = arith.constant 0 : index
    %13 = vector.load %arg4[%c0_10, %c0_11] : memref<8x4xf32, #tpu.memory_space<vmem>>, vector<8x4xf32>
    %cst_12 = arith.constant dense<0.000000e+00> : vector<2x4xf32>
    %14 = tpu.matmul %12, %13, %cst_12 {dimension_numbers = #tpu.dot_dimension_numbers<[1], [0], [0], [1], [0, 0, 1, 1], [], []>} : vector<2x8xf32>, vector<8x4xf32>, vector<2x4xf32> -> vector<2x4xf32>
    %c0_13 = arith.constant 0 : index
    %c0_14 = arith.constant 0 : index
    %15 = vector.load %arg5[%c0_13, %c0_14] : memref<1x4xf32, #tpu.memory_space<vmem>>, vector<1x4xf32>
    %16 = vector.broadcast %15 : vector<1x4xf32> to vector<2x4xf32>
    %17 = arith.addf %14, %16 : vector<2x4xf32>
    %cst_15 = arith.constant 3.000000e+00 : f32
    %18 = vector.broadcast %cst_15 : f32 to vector<2x4xf32>
    %19 = arith.addf %17, %18 : vector<2x4xf32>
    %cst_16 = arith.constant 0.166666672 : f32
    %20 = vector.broadcast %cst_16 : f32 to vector<2x4xf32>
    %21 = arith.mulf %19, %20 : vector<2x4xf32>
    %cst_17 = arith.constant 0.000000e+00 : f32
    %cst_18 = arith.constant 1.000000e+00 : f32
    %22 = vector.broadcast %cst_17 : f32 to vector<2x4xf32>
    %23 = arith.maximumf %22, %21 : vector<2x4xf32>
    %24 = vector.broadcast %cst_18 : f32 to vector<2x4xf32>
    %25 = arith.minimumf %24, %23 : vector<2x4xf32>
    %26 = vector.shape_cast %25 : vector<2x4xf32> to vector<2x4x1xf32>
    %27 = vector.broadcast %26 : vector<2x4x1xf32> to vector<2x4x256xf32>
    %28 = arith.mulf %0, %27 : vector<2x4x256xf32>
    %c0_19 = arith.constant 0 : index
    %c0_20 = arith.constant 0 : index
    %c0_21 = arith.constant 0 : index
    %29 = vector.load %arg6[%c0_19, %c0_20, %c0_21] : memref<2x4x256xf32, #tpu.memory_space<vmem>>, vector<2x4x256xf32>
    tpu.vector_store %arg6[%c0_19, %c0_20, %c0_21], %28 {strides = array<i32>} : memref<2x4x256xf32, #tpu.memory_space<vmem>>, vector<2x4x256xf32>,
    return
  }
  func.func @transform_0(%arg0: i32) -> (i32, i32, i32) {
    %c0_i32 = arith.constant 0 : i32
    %c0_i32_0 = arith.constant 0 : i32
    %c0_i32_1 = arith.constant 0 : i32
    return %arg0, %c0_i32, %c0_i32_0 : i32, i32, i32
  }
  func.func @transform_1(%arg0: i32) -> (i32, i32) {
    %c0_i32 = arith.constant 0 : i32
    %c0_i32_0 = arith.constant 0 : i32
    %c0_i32_1 = arith.constant 0 : i32
    return %c0_i32, %c0_i32_0 : i32, i32
  }
  func.func @transform_2(%arg0: i32) -> (i32, i32) {
    %c0_i32 = arith.constant 0 : i32
    %c0_i32_0 = arith.constant 0 : i32
    %c0_i32_1 = arith.constant 0 : i32
    return %c0_i32, %c0_i32_0 : i32, i32
  }
  func.func @transform_3(%arg0: i32) -> (i32, i32) {
    %c0_i32 = arith.constant 0 : i32
    %c0_i32_0 = arith.constant 0 : i32
    %c0_i32_1 = arith.constant 0 : i32
    return %c0_i32, %c0_i32_0 : i32, i32
  }
  func.func @transform_4(%arg0: i32) -> (i32, i32) {
    %c0_i32 = arith.constant 0 : i32
    %c0_i32_0 = arith.constant 0 : i32
    %c0_i32_1 = arith.constant 0 : i32
    return %c0_i32, %c0_i32_0 : i32, i32
  }
  func.func @transform_5(%arg0: i32) -> (i32, i32, i32) {
    %c0_i32 = arith.constant 0 : i32
    %c0_i32_0 = arith.constant 0 : i32
    %c0_i32_1 = arith.constant 0 : i32
    return %arg0, %c0_i32, %c0_i32_0 : i32, i32, i32
  }
}

</mosaic_0001>

<llo_original>
// kernel: tpu_custom_call.1
$region0: #{tpu_custom_call.1}
  #allocation0 [shape = 'u32[]', space=smem, size = 0x4, offset = 0x4, fixed_abs, tag = 'smem constant byte address 0x4 - core index']
  #allocation1 [shape = 'u32[72,128]{1,0:T(1,128)}', space=vmem, size = 0x9000, scoped, tag = 'internal scratch']
  %s0 = inlined_call_operand.hbm [shape: f32[2,4,256], index: 0, kind: input, shape index: {}]
  %s1 = inlined_call_operand.vmem [shape: f32[4,8], index: 1, kind: input, shape index: {}]
  %s2 = inlined_call_operand.vmem [shape: f32[1,8], index: 2, kind: input, shape index: {}]
  %s3 = inlined_call_operand.vmem [shape: f32[8,4], index: 3, kind: input, shape index: {}]
  %s4 = inlined_call_operand.vmem [shape: f32[1,4], index: 4, kind: input, shape index: {}]
  %s5 = inlined_call_operand.hbm [shape: f32[2,4,256], index: 5, kind: output, shape index: {}]
  %s6 = sld [smem:[#allocation0]]
  $region34: #{tpu_custom_call.1} parent=0
    _
  %s8 = ssub.s32 1, %s6
  %s9 = scalar_select 0, %s8, %s6
  $region1: #{tpu_custom_call.1} parent=0
    #allocation2 [shape = 'u8[8192]{0}', space=vmem, size = 0x2000, scoped, tag = 'input window, operand 0, single buffered']
    #allocation3 [shape = 's32[1]{0}', space=sflag, size = 0x4, scoped, tag = 'scoped memory for tpu_custom_call.1']
    #allocation4 [shape = 's32[1]{0}', space=sflag, size = 0x4, scoped, tag = 'scoped memory for tpu_custom_call.1']
    #allocation5 [shape = 'u8[8192]{0}', space=vmem, size = 0x2000, scoped, tag = 'output window, operand 0, single buffered']
    %10 = vsyncpa [#allocation3], 0
    %11 = vsyncpa [#allocation4], 0
    // Predicated region
    $region2: #{tpu_custom_call.1} parent=1 // pred_check
      _
    $region3: #{tpu_custom_call.1} parent=1 // pred_check_branch
      %13 = sbr.rel (0) target = $region5
    $region4: #{tpu_custom_call.1} parent=1 // pred_region
      %15 = vsyncadd [#allocation3], 0
      %s16 = sshll.u32 %s0, 4
      %s17 = int_to_ptr.hbm [resolvable:$true] %s16
      %s18 = sshll.u32 [#allocation2], 4
      %s19 = int_to_ptr.vmem [resolvable:$true] %s18
      %24 = dma.hbm_to_vmem [thread:$0]  %s17, 256, %s19, [#allocation3], 128, 128, 8
    $region5: #{tpu_custom_call.1} parent=1 // pred_fallthru
      _
    // Predicated region
    $region6: #{tpu_custom_call.1} parent=1 // pred_check
      _
    $region7: #{tpu_custom_call.1} parent=1 // pred_check_branch
      %26 = sbr.rel (0) target = $region9
    $region8: #{tpu_custom_call.1} parent=1 // pred_region
      _
    $region9: #{tpu_custom_call.1} parent=1 // pred_fallthru
      _
    // Predicated region
    $region10: #{tpu_custom_call.1} parent=1 // pred_check
      _
    $region11: #{tpu_custom_call.1} parent=1 // pred_check_branch
      %28 = sbr.rel (0) target = $region13
    $region12: #{tpu_custom_call.1} parent=1 // pred_region
      _
    $region13: #{tpu_custom_call.1} parent=1 // pred_fallthru
      _
    // Predicated region
    $region14: #{tpu_custom_call.1} parent=1 // pred_check
      _
    $region15: #{tpu_custom_call.1} parent=1 // pred_check_branch
      %30 = sbr.rel (0) target = $region17
    $region16: #{tpu_custom_call.1} parent=1 // pred_region
      _
    $region17: #{tpu_custom_call.1} parent=1 // pred_fallthru
      _
    // Predicated region
    $region18: #{tpu_custom_call.1} parent=1 // pred_check
      _
    $region19: #{tpu_custom_call.1} parent=1 // pred_check_branch
      %32 = sbr.rel (0) target = $region21
    $region20: #{tpu_custom_call.1} parent=1 // pred_region
      _
    $region21: #{tpu_custom_call.1} parent=1 // pred_fallthru
      _
    // Predicated region
    $region22: #{tpu_custom_call.1} parent=1 // pred_check
      _
    $region23: #{tpu_custom_call.1} parent=1 // pred_check_branch
      %34 = sbr.rel (0) target = $region25
    $region24: #{tpu_custom_call.1} parent=1 // pred_region
      %36 = dma.done [#allocation3], 256
    $region25: #{tpu_custom_call.1} parent=1 // pred_fallthru
      _
    %v37 = vld [vmem:[#allocation2] sm:$0xff]
    %v38 = vld [vmem:[#allocation2 + $0x8] sm:$0xff]
    %41 = vst [vmem:[#allocation1] ss:$2 sm:$0xff] %v37
    %v42 = vld.sshfl [vmem:[#allocation1] sm:$0xff pattern:$0x75316420]
    %v43 = vld.sshfl [vmem:[#allocation1 + $0x8] sm:$0xff pattern:$0x75316420]
    %s44 = scalar_lea.vmem [#allocation1], 16
    %45 = vst [vmem:[%s44] ss:$2 sm:$0xff] %v38
    %v46 = vld.sshfl [vmem:[#allocation1 + $0x10] sm:$0xff pattern:$0x75316420]
    %v47 = vld.sshfl [vmem:[#allocation1 + $0x18] sm:$0xff pattern:$0x75316420]
    %vm52 = vcmask 1043456
    %v53 = vsel %vm52, %v42, 0.0
    %v54 = vsel %vm52, %v43, 0.0
    %v55 = vadd.f32 %v53, %v54
    %56 = vadd.xlane.f32.xlu0 %v55
    %v57 = vpop.xlane.xlu0 %56
    %v58 = vsel %vm52, %v46, 0.0
    %v59 = vsel %vm52, %v47, 0.0
    %v60 = vadd.f32 %v58, %v59
    %61 = vadd.xlane.f32.xlu0 %v60
    %v62 = vpop.xlane.xlu0 %61
    %v63 = vmul.f32 %v57, 0.00390625
    %v64 = vmul.f32 %v62, 0.00390625
    %v65 = vld [vmem:[%s1] sm:$0xf]
    %v66 = vld [vmem:[%s2] sm:$0x1]
    %v68 = vperm.slane %v66, 0
    %v72 = vlaneseq
    %v73 = vand.u32 %v72, 127
    %v74 = vperm.slane %v63, %v73
    %v75 = vperm.slane %v64, %v73
    %vm76 = vcmask 1041409
    %v77 = vsel %vm76, %v75, %v74
    %vm78 = vcmask 31744
    %v79 = vsel %vm78, %v77, 0
    %v82 = vsel %vm52, %v65, 0
    %84 = vmatpush.msra.mxu0 0.0
    %85 = vmatpush.msra.mxu0 0.0
    %86 = vmatpush.msra.mxu0 0.0
    %87 = vmatpush.msra.mxu0 0.0
    %88 = vmatpush.msra.mxu0 0.0
    %89 = vmatpush.msra.mxu0 0.0
    %90 = vmatpush.msra.mxu0 0.0
    %91 = vmatpush.msra.mxu0 0.0
    %92 = vmatpush.msra.mxu0 0.0
    %93 = vmatpush.msra.mxu0 0.0
    %94 = vmatpush.msra.mxu0 0.0
    %95 = vmatpush.msra.mxu0 0.0
    %96 = vmatpush.msra.mxu0 0.0
    %97 = vmatpush.msra.mxu0 0.0
    %98 = vmatpush.msra.mxu0 0.0
    %99 = vmatpush.msra.mxu0 %v82
    %100 = vmatmul.f32.gmra.mxu0 %v79
    %v101 = vpop.f32.mrf.mxu0
    %v102 = vadd.f32 %v68, %v101
    %103 = vdwg.mxu0
    %v104 = vmax.f32 %v102, 0.0
    %v105 = vmin.f32 %v104, 6.0
    %v106 = vld [vmem:[%s3] sm:$0xff]
    %v107 = vld [vmem:[%s4] sm:$0x1]
    %v109 = vperm.slane %v107, 0
    %vm111 = vcmask 64512
    %v113 = vsel %vm111, %v105, 0
    %115 = vmatpush.msra.mxu0 0.0
    %116 = vmatpush.msra.mxu0 0.0
    %117 = vmatpush.msra.mxu0 0.0
    %118 = vmatpush.msra.mxu0 0.0
    %119 = vmatpush.msra.mxu0 0.0
    %120 = vmatpush.msra.mxu0 0.0
    %121 = vmatpush.msra.mxu0 0.0
    %122 = vmatpush.msra.mxu0 0.0
    %123 = vmatpush.msra.mxu0 0.0
    %124 = vmatpush.msra.mxu0 0.0
    %125 = vmatpush.msra.mxu0 0.0
    %126 = vmatpush.msra.mxu0 0.0
    %127 = vmatpush.msra.mxu0 0.0
    %128 = vmatpush.msra.mxu0 0.0
    %129 = vmatpush.msra.mxu0 0.0
    %130 = vmatpush.msra.mxu0 %v106
    %131 = vmatmul.f32.gmra.mxu0 %v113
    %v132 = vpop.f32.mrf.mxu0
    %v133 = vadd.f32 %v109, %v132
    %134 = vdwg.mxu0
    %v135 = vadd.f32 %v133, 3.0
    %v136 = vmul.f32 %v135, 0.16666667
    %v137 = vmax.f32 %v136, 0.0
    %v138 = vmin.f32 %v137, 1.0
    %v139 = vperm.slane %v138, 0
    %v140 = vlaneseq
    %v141 = vshrl.u32 %v140, 7
    %143 = vset.pattern.permute.xlu0 %v141
    %144 = vperm.xlu0 %143, %v139
    %v145 = vpop.permute.xlu0 %144
    %v146 = vperm.slane %v138, 1
    %v147 = vlaneseq
    %v148 = vshrl.u32 %v147, 7
    %150 = vset.pattern.permute.xlu0 %v148
    %151 = vperm.xlu0 %150, %v146
    %v152 = vpop.permute.xlu0 %151
    %v156 = vunpack.c.l.s4 839922192
    %v157 = vunpack.c.0.s8 %v156
    %v158 = vperm.slane %v145, %v157
    %v160 = vunpack.c.l.s4 839922192
    %v161 = vunpack.c.0.s8 %v160
    %v162 = vperm.slane %v152, %v161
    %v165 = vmul.f32 %v37, %v158
    %v166 = vmul.f32 %v38, %v162
    %167 = vst [vmem:[#allocation5] sm:$0xff] %v165
    %168 = vst [vmem:[#allocation5 + $0x8] sm:$0xff] %v166
    // Predicated region
    $region26: #{tpu_custom_call.1} parent=1 // pred_check
      _
    $region27: #{tpu_custom_call.1} parent=1 // pred_check_branch
      %170 = sbr.rel (0) target = $region29
    $region28: #{tpu_custom_call.1} parent=1 // pred_region
      %172 = vsyncadd [#allocation4], 0
      %s173 = sshll.u32 [#allocation5], 4
      %s174 = int_to_ptr.vmem [resolvable:$true] %s173
      %s175 = sshll.u32 %s5, 4
      %s176 = int_to_ptr.hbm [resolvable:$true] %s175
      %181 = dma.vmem_to_hbm [thread:$0]  %s174, 256, %s176, [#allocation4], 128, 128, 8
    $region29: #{tpu_custom_call.1} parent=1 // pred_fallthru
      _
    // Predicated region
    $region30: #{tpu_custom_call.1} parent=1 // pred_check
      _
    $region31: #{tpu_custom_call.1} parent=1 // pred_check_branch
      %183 = sbr.rel (0) target = $region33
    $region32: #{tpu_custom_call.1} parent=1 // pred_region
      %185 = dma.done [#allocation4], 256
    $region33: #{tpu_custom_call.1} parent=1 // pred_fallthru
      _
    %186 = vsyncpa [#allocation3], 1
    %187 = vsyncpa [#allocation4], 1

</llo_original>
